<compile_context>
chip_gen: v7x
topology: tpu7x:2x2x1
jax: 0.10.0
libtpu: 0.0.40
codegen_flags: <defaults>
</compile_context>

<pallas_src>
import functools

import jax
import jax.numpy as jnp
from jax.experimental import pallas as pl
from jax.experimental.pallas import tpu as pltpu


def _ada_layer_norm_kernel(x_ref, s_ref, w_ref, b_ref, o_ref, *, eps, channels):
    """One (batch, time-tile) block of style-conditioned layer norm.

    x_ref: (1, TT, C)   activations
    s_ref: (1, TT, S)   style, time-major (contiguous DMA, native MXU matmul)
    w_ref: (S, 2C)      fused [gamma | beta] projection weights
    b_ref: (1, 2C)      fused bias; the "+1" of (1 + gamma) is folded into the gamma half
    o_ref: (1, TT, C)
    """
    x = x_ref[0].astype(jnp.float32)                       # (TT, C) f32 for the reduction
    s = s_ref[0]                                           # (TT, S) native dtype -> MXU

    # Single fused modulation matmul with f32 accumulation.
    h = jnp.dot(s, w_ref[...], preferred_element_type=jnp.float32)   # (TT, 2C)
    h = h + b_ref[...].astype(jnp.float32)
    gamma1 = h[:, :channels]                               # (TT, C), includes the +1
    beta = h[:, channels:]                                 # (TT, C)

    # One-pass moments: mean and E[x^2] computed directly from x (biased variance).
    inv_c = 1.0 / channels
    mean = jnp.sum(x, axis=-1, keepdims=True) * inv_c      # (TT, 1)
    msq = jnp.sum(x * x, axis=-1, keepdims=True) * inv_c   # (TT, 1)
    var = jnp.maximum(msq - mean * mean, 0.0)
    inv = jax.lax.rsqrt(var + eps)                         # EUP, cheap

    o_ref[0] = (gamma1 * ((x - mean) * inv) + beta).astype(o_ref.dtype)


def _working_set_bytes(tt, C, S, x_itemsize, s_itemsize):
    io = tt * (2 * C * x_itemsize + S * s_itemsize)        # x + out + s tiles
    temps = tt * 2 * C * 4 + 4 * tt * C * 4                # f32 h + layer-norm temporaries
    return 2 * io + temps                                  # double-buffered IO + temps


def _choose_time_tile(T, C, S, x_itemsize, s_itemsize, budget, min_steps):
    """Largest time tile whose working set fits `budget`; tiles smaller than T
    are multiples of 128 (comfortably sublane-aligned). Then shrink, if possible,
    until the time axis yields at least `min_steps` grid steps."""
    candidates = [T] + [c for c in (4096, 2048, 1024, 512, 256, 128) if c < T]
    idx = len(candidates) - 1
    for i, c in enumerate(candidates):
        if _working_set_bytes(c, C, S, x_itemsize, s_itemsize) <= budget:
            idx = i
            break
    while pl.cdiv(T, candidates[idx]) < min_steps and idx + 1 < len(candidates):
        idx += 1
    return candidates[idx]


def ada_layer_norm(x, s, fc_weight, fc_bias, *, eps=1e-5, time_tile=None):
    """
    x: (B, T, C)  float
    s: (B, S, T)  float   (PyTorch layout)
    fc_weight: (2C, S)    (PyTorch nn.Linear weight layout)
    fc_bias:   (2C,)
    returns: (B, T, C)
    """
    B, T, C = x.shape
    S = s.shape[1]
    assert s.shape == (B, S, T), s.shape
    assert fc_weight.shape == (2 * C, S), fc_weight.shape
    assert fc_bias.shape == (2 * C,), fc_bias.shape

    # Host-side (XLA) prep, cheap relative to streaming x:
    #  * transpose s once -> native (TT, S) @ (S, 2C) matmul, contiguous s DMA.
    #  * fuse gamma/beta weights, fold the "+1" into the gamma bias half.
    #  * cast weights to s's dtype so the MXU sees one explicit operand dtype.
    s_t = jnp.swapaxes(s, 1, 2)                                   # (B, T, S)
    w = jnp.swapaxes(fc_weight, 0, 1).astype(s_t.dtype)           # (S, 2C)
    bias = jnp.concatenate([fc_bias[:C] + 1.0, fc_bias[C:]])
    bias = bias.reshape(1, 2 * C).astype(jnp.float32)             # (1, 2C)

    x_itemsize = jnp.dtype(x.dtype).itemsize
    s_itemsize = jnp.dtype(s_t.dtype).itemsize

    # Generation-aware budgeting: v7x has 64 MiB VMEM/TC and 2 TCs; v5e/v6e have 128 MiB.
    try:
        vmem_capacity = pltpu.get_tpu_info().vmem_capacity_bytes
    except Exception:
        vmem_capacity = 64 * 2**20                                # conservative fallback
    small_vmem = vmem_capacity <= 80 * 2**20
    budget = (18 if small_vmem else 28) * 2**20
    # v7x: >= 4 total grid steps so both TCs get work; others: >= 2 for pipeline overlap.
    min_steps = -(-(4 if small_vmem else 2) // B)                 # ceil(k / B)

    if time_tile is None:
        TT = _choose_time_tile(T, C, S, x_itemsize, s_itemsize, budget, min_steps)
    else:
        TT = time_tile
    grid = (B, pl.cdiv(T, TT))

    const_bytes = S * 2 * C * jnp.dtype(w.dtype).itemsize + 2 * C * 4
    need = 2 * _working_set_bytes(TT, C, S, x_itemsize, s_itemsize) + 2 * const_bytes
    cap = (40 if small_vmem else 64) * 2**20
    vmem_limit = int(min(max(need, 16 * 2**20), cap))

    kernel = functools.partial(_ada_layer_norm_kernel, eps=eps, channels=C)

    return pl.pallas_call(
        kernel,
        out_shape=jax.ShapeDtypeStruct((B, T, C), x.dtype),
        grid_spec=pltpu.PrefetchScalarGridSpec(
            num_scalar_prefetch=0,
            grid=grid,
            in_specs=[
                pl.BlockSpec((1, TT, C), lambda b, t: (b, t, 0)),   # x tile
                pl.BlockSpec((1, TT, S), lambda b, t: (b, t, 0)),   # s tile (time-major)
                pl.BlockSpec((S, 2 * C), lambda b, t: (0, 0)),      # fused weights
                pl.BlockSpec((1, 2 * C), lambda b, t: (0, 0)),      # fused bias (+1 folded)
            ],
            out_specs=pl.BlockSpec((1, TT, C), lambda b, t: (b, t, 0)),
        ),
        compiler_params=pltpu.CompilerParams(
            dimension_semantics=("parallel", "parallel"),
            vmem_limit_bytes=vmem_limit,
        ),
    )(x, s_t, w, bias)


def _reference(x, s, fc_weight, fc_bias, eps=1e-5):
    # Pure-JAX reference of the PyTorch forward.
    s_t = jnp.swapaxes(s, 1, 2)                              # (B, T, S)
    h = s_t @ fc_weight.T + fc_bias                          # (B, T, 2C)
    C = x.shape[-1]
    gamma = h[..., :C]
    beta = h[..., C:]
    mean = jnp.mean(x, axis=-1, keepdims=True)
    var = jnp.mean((x - mean) ** 2, axis=-1, keepdims=True)
    xn = (x - mean) / jnp.sqrt(var + eps)
    return (1.0 + gamma) * xn + beta


if __name__ == "__main__":
    # Small deterministic example consistent with the module:
    #   batch=2, time=8, channels=32, style_dim=16
    B, T, C, S = 2, 8, 32, 16
    key = jax.random.PRNGKey(0)
    kx, ks, kw, kb = jax.random.split(key, 4)

    x = jax.random.normal(kx, (B, T, C), dtype=jnp.float32)
    s = jax.random.normal(ks, (B, S, T), dtype=jnp.float32)
    # nn.Linear(style_dim, channels*2): weight (2C, S), bias (2C,)
    fc_weight = jax.random.normal(kw, (2 * C, S), dtype=jnp.float32) * 0.1
    fc_bias = jax.random.normal(kb, (2 * C,), dtype=jnp.float32) * 0.1

    out = jax.block_until_ready(ada_layer_norm(x, s, fc_weight, fc_bias, eps=1e-5))
    ref = _reference(x, s, fc_weight, fc_bias, eps=1e-5)

    assert out.shape == (B, T, C)
    assert jnp.allclose(out, ref, atol=1e-4, rtol=1e-4), float(jnp.max(jnp.abs(out - ref)))

    print("KERNEL_OK")
</pallas_src>

<mosaic_0001>
module attributes {stable_mosaic.version = 11 : i64} {
  func.func @_ada_layer_norm_kernel(%arg0: i32, %arg1: i32, %arg2: memref<1x8x32xf32, #tpu.memory_space<vmem>>, %arg3: memref<1x8x16xf32, #tpu.memory_space<vmem>>, %arg4: memref<16x64xf32, #tpu.memory_space<vmem>>, %arg5: memref<1x64xf32, #tpu.memory_space<vmem>>, %arg6: memref<1x8x32xf32, #tpu.memory_space<vmem>>) attributes {dimension_semantics = [#tpu.dimension_semantics<parallel>, #tpu.dimension_semantics<parallel>], iteration_bounds = array<i64: 2, 1>, scalar_prefetch = 0 : i64, scratch_operands = 0 : i64, tpu.core_type = #tpu.core_type<tc>, window_params = [{transform_indices = @transform_0, window_bounds = array<i64: 1, 8, 32>}, {transform_indices = @transform_1, window_bounds = array<i64: 1, 8, 16>}, {pipeline_mode = #tpu.pipeline_mode<synchronous>, transform_indices = @transform_2, window_bounds = array<i64: 16, 64>}, {pipeline_mode = #tpu.pipeline_mode<synchronous>, transform_indices = @transform_3, window_bounds = array<i64: 1, 64>}, {transform_indices = @transform_4, window_bounds = array<i64: 1, 8, 32>}]} {
    %c0 = arith.constant 0 : index
    %c0_0 = arith.constant 0 : index
    %c0_1 = arith.constant 0 : index
    %0 = vector.load %arg2[%c0, %c0_0, %c0_1] : memref<1x8x32xf32, #tpu.memory_space<vmem>>, vector<1x8x32xf32>
    %1 = vector.shape_cast %0 : vector<1x8x32xf32> to vector<8x32xf32>
    %c0_2 = arith.constant 0 : index
    %c0_3 = arith.constant 0 : index
    %c0_4 = arith.constant 0 : index
    %2 = vector.load %arg3[%c0_2, %c0_3, %c0_4] : memref<1x8x16xf32, #tpu.memory_space<vmem>>, vector<1x8x16xf32>
    %3 = vector.shape_cast %2 : vector<1x8x16xf32> to vector<8x16xf32>
    %c0_5 = arith.constant 0 : index
    %c0_6 = arith.constant 0 : index
    %4 = vector.load %arg4[%c0_5, %c0_6] : memref<16x64xf32, #tpu.memory_space<vmem>>, vector<16x64xf32>
    %cst = arith.constant dense<0.000000e+00> : vector<8x64xf32>
    %5 = tpu.matmul %3, %4, %cst {dimension_numbers = #tpu.dot_dimension_numbers<[1], [0], [0], [1], [0, 0, 1, 1], [], []>} : vector<8x16xf32>, vector<16x64xf32>, vector<8x64xf32> -> vector<8x64xf32>
    %c0_7 = arith.constant 0 : index
    %c0_8 = arith.constant 0 : index
    %6 = vector.load %arg5[%c0_7, %c0_8] : memref<1x64xf32, #tpu.memory_space<vmem>>, vector<1x64xf32>
    %7 = vector.broadcast %6 : vector<1x64xf32> to vector<8x64xf32>
    %8 = arith.addf %5, %7 : vector<8x64xf32>
    %9 = vector.extract_strided_slice %8 {offsets = [0, 0], sizes = [8, 32], strides = [1, 1]} : vector<8x64xf32> to vector<8x32xf32>
    %10 = vector.extract_strided_slice %8 {offsets = [0, 32], sizes = [8, 32], strides = [1, 1]} : vector<8x64xf32> to vector<8x32xf32>
    %cst_9 = arith.constant dense<0.000000e+00> : vector<8xf32>
    %11 = vector.multi_reduction <add>, %1, %cst_9 [1] : vector<8x32xf32> to vector<8xf32>
    %12 = vector.shape_cast %11 : vector<8xf32> to vector<8x1xf32>
    %cst_10 = arith.constant 3.125000e-02 : f32
    %13 = vector.broadcast %cst_10 : f32 to vector<8x1xf32>
    %14 = arith.mulf %12, %13 : vector<8x1xf32>
    %15 = arith.mulf %1, %1 : vector<8x32xf32>
    %cst_11 = arith.constant dense<0.000000e+00> : vector<8xf32>
    %16 = vector.multi_reduction <add>, %15, %cst_11 [1] : vector<8x32xf32> to vector<8xf32>
    %17 = vector.shape_cast %16 : vector<8xf32> to vector<8x1xf32>
    %cst_12 = arith.constant 3.125000e-02 : f32
    %18 = vector.broadcast %cst_12 : f32 to vector<8x1xf32>
    %19 = arith.mulf %17, %18 : vector<8x1xf32>
    %20 = arith.mulf %14, %14 : vector<8x1xf32>
    %21 = arith.subf %19, %20 : vector<8x1xf32>
    %cst_13 = arith.constant 0.000000e+00 : f32
    %22 = vector.broadcast %cst_13 : f32 to vector<8x1xf32>
    %23 = arith.maximumf %21, %22 : vector<8x1xf32>
    %cst_14 = arith.constant 9.99999974E-6 : f32
    %24 = vector.broadcast %cst_14 : f32 to vector<8x1xf32>
    %25 = arith.addf %23, %24 : vector<8x1xf32>
    %26 = math.rsqrt %25 : vector<8x1xf32>
    %27 = vector.broadcast %14 : vector<8x1xf32> to vector<8x32xf32>
    %28 = arith.subf %1, %27 : vector<8x32xf32>
    %29 = vector.broadcast %26 : vector<8x1xf32> to vector<8x32xf32>
    %30 = arith.mulf %28, %29 : vector<8x32xf32>
    %31 = arith.mulf %9, %30 : vector<8x32xf32>
    %32 = arith.addf %31, %10 : vector<8x32xf32>
    %c0_15 = arith.constant 0 : index
    %c0_16 = arith.constant 0 : index
    %c0_17 = arith.constant 0 : index
    %33 = vector.load %arg6[%c0_15, %c0_16, %c0_17] : memref<1x8x32xf32, #tpu.memory_space<vmem>>, vector<1x8x32xf32>
    %34 = vector.shape_cast %33 : vector<1x8x32xf32> to vector<8x32xf32>
    %35 = vector.shape_cast %32 : vector<8x32xf32> to vector<1x8x32xf32>
    tpu.vector_store %arg6[%c0_15, %c0_16, %c0_17], %35 {strides = array<i32>} : memref<1x8x32xf32, #tpu.memory_space<vmem>>, vector<1x8x32xf32>,
    return
  }
  func.func @transform_0(%arg0: i32, %arg1: i32) -> (i32, i32, i32) {
    %c0_i32 = arith.constant 0 : i32
    %c0_i32_0 = arith.constant 0 : i32
    return %arg0, %arg1, %c0_i32 : i32, i32, i32
  }
  func.func @transform_1(%arg0: i32, %arg1: i32) -> (i32, i32, i32) {
    %c0_i32 = arith.constant 0 : i32
    %c0_i32_0 = arith.constant 0 : i32
    return %arg0, %arg1, %c0_i32 : i32, i32, i32
  }
  func.func @transform_2(%arg0: i32, %arg1: i32) -> (i32, i32) {
    %c0_i32 = arith.constant 0 : i32
    %c0_i32_0 = arith.constant 0 : i32
    %c0_i32_1 = arith.constant 0 : i32
    return %c0_i32, %c0_i32_0 : i32, i32
  }
  func.func @transform_3(%arg0: i32, %arg1: i32) -> (i32, i32) {
    %c0_i32 = arith.constant 0 : i32
    %c0_i32_0 = arith.constant 0 : i32
    %c0_i32_1 = arith.constant 0 : i32
    return %c0_i32, %c0_i32_0 : i32, i32
  }
  func.func @transform_4(%arg0: i32, %arg1: i32) -> (i32, i32, i32) {
    %c0_i32 = arith.constant 0 : i32
    %c0_i32_0 = arith.constant 0 : i32
    return %arg0, %arg1, %c0_i32 : i32, i32, i32
  }
}

</mosaic_0001>

<llo_original>
// kernel: tpu_custom_call.1
$region0: #{tpu_custom_call.1}
  #allocation0 [shape = 'u32[]', space=smem, size = 0x4, offset = 0x4, fixed_abs, tag = 'smem constant byte address 0x4 - core index']
  #allocation1 [shape = 'u32[144,128]{1,0:T(1,128)}', space=vmem, size = 0x12000, scoped, tag = 'internal scratch']
  %s0 = inlined_call_operand.hbm [shape: f32[2,8,32], index: 0, kind: input, shape index: {}]
  %s1 = inlined_call_operand.hbm [shape: f32[2,8,16], index: 1, kind: input, shape index: {}]
  %s2 = inlined_call_operand.hbm [shape: f32[16,64], index: 2, kind: input, shape index: {}]
  %s3 = inlined_call_operand.vmem [shape: f32[1,64], index: 3, kind: input, shape index: {}]
  %s4 = inlined_call_operand.hbm [shape: f32[2,8,32], index: 4, kind: output, shape index: {}]
  %s5 = sld [smem:[#allocation0]]
  $region61: #{tpu_custom_call.1} parent=0
    _
  %s7 = ssub.s32 1, %s5
  %s8 = scalar_select 0, %s7, %s5
  $region1: #{tpu_custom_call.1} parent=0
    #allocation2 [shape = 'u8[8192]{0}', space=vmem, size = 0x2000, scoped, tag = 'input window, operand 0']
    #allocation3 [shape = 's32[2]{0}', space=sflag, size = 0x8, scoped, tag = 'scoped memory for tpu_custom_call.1']
    #allocation4 [shape = 's32[2]{0}', space=sflag, size = 0x8, scoped, tag = 'scoped memory for tpu_custom_call.1']
    #allocation5 [shape = 'u8[8192]{0}', space=vmem, size = 0x2000, scoped, tag = 'input window, operand 1']
    #allocation6 [shape = 's32[2]{0}', space=sflag, size = 0x8, scoped, tag = 'scoped memory for tpu_custom_call.1']
    #allocation7 [shape = 'u8[8192]{0}', space=vmem, size = 0x2000, scoped, tag = 'input window, operand 2, single buffered']
    #allocation8 [shape = 'u8[8192]{0}', space=vmem, size = 0x2000, scoped, tag = 'output window, operand 0']
    %9 = vsyncpa [#allocation3], 0
    %s10 = scalar_lea.sflag [#allocation3], 1
    %11 = vsyncpa %s10, 0
    %12 = vsyncpa [#allocation6], 0
    %s13 = scalar_lea.sflag [#allocation6], 1
    %14 = vsyncpa %s13, 0
    %15 = vsyncpa [#allocation4], 0
    %s16 = scalar_lea.sflag [#allocation4], 1
    %17 = vsyncpa %s16, 0
    loop: start=0, step=1, limit=4
    $region2: #{tpu_custom_call.1} parent=1 // loop_pre_header
      _
    $region3: #{tpu_custom_call.1} parent=1 // loop_header
      %s19 = sphi 0, %s23
      %p20 = scmp.ge.s32.totalorder %s19, 4
      %s26 = sphi 0, %s38
      %s27 = sphi 0, %s34
      %s28 = sphi 0, %s26
      %s29 = sphi 0, %s27
      %s30 = sphi 0, %s28
      %s31 = sphi 0, %s29
      %s43 = sphi 0, %s45
      %s46 = sphi 0, %s43
      %s47 = sphi 0, %s46
      %s63 = sphi 0, %s47
      %s71 = sphi 0, %s73
      %s74 = sphi 0, %s71
      %s75 = sphi 0, %s74
      %s91 = sphi 0, %s75
      %s95 = sphi 0, %s95
      %s97 = sphi 0, %s95
      %s98 = sphi 0, %s97
      %s112 = sphi 0, %s98
      %s116 = sphi 0, %s116
      %s118 = sphi 0, %s116
      %s119 = sphi 0, %s118
      %s133 = sphi 0, %s119
      %s141 = sphi 0, %s143
      %s144 = sphi 0, %s141
      %s145 = sphi 0, %s144
      %s161 = sphi 0, %s145
    $region4: #{tpu_custom_call.1} parent=1 // loop_header_branch
      %22 = sbr.rel (%p20) target = $region8
    $region5: #{tpu_custom_call.1} parent=1 // loop_body
      %s24 = ssub.s32 %s19, 1
      %s25 = ssub.s32 %s19, 2
      %s32 = sadd.s32 1, %s27
      %p33 = scmp.ge.s32.totalorder %s32, 1
      %s34 = scalar_select %p33, 0, %s32
      %s35 = sadd.s32 1, %s26
      %s36 = scalar_select %p33, %s35, %s26
      %p37 = scmp.ge.s32.totalorder %s36, 2
      %s38 = scalar_select %p37, 0, %s36
      %s39 = ssub.s32 %s26, %s38
      %s40 = ssub.s32 %s27, %s34
      %s41 = sor.u32 %s39, %s40
      %p42 = scmp.eq.s32.totalorder %s41, 0
      %s44 = sadd.s32 %s43, 1
      %s45 = scalar_select %p42, %s43, %s44
      %p48 = pneg %p42
      %p49 = scmp.eq.s32.totalorder %s19, 1
      %p50 = por %p48, %p49
      %p51 = scmp.ne.s32.totalorder %s43, %s46
      %p52 = scmp.eq.s32.totalorder %s19, 0
      %p53 = por %p51, %p52
      %p54 = scmp.ne.s32.totalorder %s43, %s46
      %p55 = scmp.eq.s32.totalorder %s24, 1
      %p56 = por %p54, %p55
      %p57 = scmp.ne.s32.totalorder %s46, %s47
      %p58 = scmp.eq.s32.totalorder %s24, 0
      %p59 = por %p57, %p58
      %p60 = scmp.ne.s32.totalorder %s46, %s47
      %p61 = scmp.eq.s32.totalorder %s25, 1
      %p62 = por %p60, %p61
      %p64 = scmp.ne.s32.totalorder %s47, %s63
      %p65 = scmp.eq.s32.totalorder %s25, 0
      %p66 = por %p64, %p65
      %s67 = ssub.s32 %s26, %s38
      %s68 = ssub.s32 %s27, %s34
      %s69 = sor.u32 %s67, %s68
      %p70 = scmp.eq.s32.totalorder %s69, 0
      %s72 = sadd.s32 %s71, 1
      %s73 = scalar_select %p70, %s71, %s72
      %p76 = pneg %p70
      %p77 = scmp.eq.s32.totalorder %s19, 1
      %p78 = por %p76, %p77
      %p79 = scmp.ne.s32.totalorder %s71, %s74
      %p80 = scmp.eq.s32.totalorder %s19, 0
      %p81 = por %p79, %p80
      %p82 = scmp.ne.s32.totalorder %s71, %s74
      %p83 = scmp.eq.s32.totalorder %s24, 1
      %p84 = por %p82, %p83
      %p85 = scmp.ne.s32.totalorder %s74, %s75
      %p86 = scmp.eq.s32.totalorder %s24, 0
      %p87 = por %p85, %p86
      %p88 = scmp.ne.s32.totalorder %s74, %s75
      %p89 = scmp.eq.s32.totalorder %s25, 1
      %p90 = por %p88, %p89
      %p92 = scmp.ne.s32.totalorder %s75, %s91
      %p93 = scmp.eq.s32.totalorder %s25, 0
      %p94 = por %p92, %p93
      %s96 = sadd.s32 %s95, 1
      %p99 = scmp.eq.s32.totalorder %s19, 1
      %p100 = scmp.ne.s32.totalorder %s95, %s97
      %p101 = scmp.eq.s32.totalorder %s19, 0
      %p102 = por %p100, %p101
      %p103 = scmp.ne.s32.totalorder %s95, %s97
      %p104 = scmp.eq.s32.totalorder %s24, 1
      %p105 = por %p103, %p104
      %p106 = scmp.ne.s32.totalorder %s97, %s98
      %p107 = scmp.eq.s32.totalorder %s24, 0
      %p108 = por %p106, %p107
      %p109 = scmp.ne.s32.totalorder %s97, %s98
      %p110 = scmp.eq.s32.totalorder %s25, 1
      %p111 = por %p109, %p110
      %p113 = scmp.ne.s32.totalorder %s98, %s112
      %p114 = scmp.eq.s32.totalorder %s25, 0
      %p115 = por %p113, %p114
      %s117 = sadd.s32 %s116, 1
      %p120 = scmp.eq.s32.totalorder %s19, 1
      %p121 = scmp.ne.s32.totalorder %s116, %s118
      %p122 = scmp.eq.s32.totalorder %s19, 0
      %p123 = por %p121, %p122
      %p124 = scmp.ne.s32.totalorder %s116, %s118
      %p125 = scmp.eq.s32.totalorder %s24, 1
      %p126 = por %p124, %p125
      %p127 = scmp.ne.s32.totalorder %s118, %s119
      %p128 = scmp.eq.s32.totalorder %s24, 0
      %p129 = por %p127, %p128
      %p130 = scmp.ne.s32.totalorder %s118, %s119
      %p131 = scmp.eq.s32.totalorder %s25, 1
      %p132 = por %p130, %p131
      %p134 = scmp.ne.s32.totalorder %s119, %s133
      %p135 = scmp.eq.s32.totalorder %s25, 0
      %p136 = por %p134, %p135
      %s137 = ssub.s32 %s26, %s38
      %s138 = ssub.s32 %s27, %s34
      %s139 = sor.u32 %s137, %s138
      %p140 = scmp.eq.s32.totalorder %s139, 0
      %s142 = sadd.s32 %s141, 1
      %s143 = scalar_select %p140, %s141, %s142
      %p146 = pneg %p140
      %p147 = scmp.eq.s32.totalorder %s19, 1
      %p148 = por %p146, %p147
      %p149 = scmp.ne.s32.totalorder %s141, %s144
      %p150 = scmp.eq.s32.totalorder %s19, 0
      %p151 = por %p149, %p150
      %p152 = scmp.ne.s32.totalorder %s141, %s144
      %p153 = scmp.eq.s32.totalorder %s24, 1
      %p154 = por %p152, %p153
      %p155 = scmp.ne.s32.totalorder %s144, %s145
      %p156 = scmp.eq.s32.totalorder %s24, 0
      %p157 = por %p155, %p156
      %p158 = scmp.ne.s32.totalorder %s144, %s145
      %p159 = scmp.eq.s32.totalorder %s25, 1
      %p160 = por %p158, %p159
      %p162 = scmp.ne.s32.totalorder %s145, %s161
      %p163 = scmp.eq.s32.totalorder %s25, 0
      %p164 = por %p162, %p163
      %p165 = scmp.le.s32.totalorder 1, %s19
      %p166 = scmp.lt.s32.totalorder %s19, 3
      %p167 = pnand %p165, %p166
      %p168 = pneg %p167
      // Predicated region
      $region9: #{tpu_custom_call.1} parent=5 // pred_check
        _
      $region10: #{tpu_custom_call.1} parent=5 // pred_check_branch
        %170 = sbr.rel (%p167) target = $region12
      $region11: #{tpu_custom_call.1} parent=5 // pred_region
        %s171 = ssub.s32 %s19, 1
        // Predicated region
        $region13: #{tpu_custom_call.1} parent=11 // pred_check
          %p172 = pneg %p108
        $region14: #{tpu_custom_call.1} parent=11 // pred_check_branch
          %174 = sbr.rel (%p172) target = $region16
        $region15: #{tpu_custom_call.1} parent=11 // pred_region
          %s176 = ssub.s32 256, 256
          %177 = vsyncadd [#allocation6], %s176
          %s178 = sshll.u32 [#allocation7], 4
          %s179 = int_to_ptr.vmem [resolvable:$true] %s178
          %184 = dma.hbm_to_vmem [thread:$0]  %s2, 256, %s179, [#allocation6], 128, 128, 8
        $region16: #{tpu_custom_call.1} parent=11 // pred_fallthru
          _
        // Predicated region
        $region17: #{tpu_custom_call.1} parent=11 // pred_check
          %p185 = pneg %p129
        $region18: #{tpu_custom_call.1} parent=11 // pred_check_branch
          %187 = sbr.rel (%p185) target = $region20
        $region19: #{tpu_custom_call.1} parent=11 // pred_region
          _
        $region20: #{tpu_custom_call.1} parent=11 // pred_fallthru
          _
      $region12: #{tpu_custom_call.1} parent=5 // pred_fallthru
        _
      %p188 = scmp.lt.s32.totalorder %s19, 2
      // Predicated region
      $region21: #{tpu_custom_call.1} parent=5 // pred_check
        %p189 = pneg %p188
      $region22: #{tpu_custom_call.1} parent=5 // pred_check_branch
        %191 = sbr.rel (%p189) target = $region24
      $region23: #{tpu_custom_call.1} parent=5 // pred_region
        // Predicated region
        $region25: #{tpu_custom_call.1} parent=23 // pred_check
          %p192 = pneg %p53
        $region26: #{tpu_custom_call.1} parent=23 // pred_check_branch
          %194 = sbr.rel (%p192) target = $region28
        $region27: #{tpu_custom_call.1} parent=23 // pred_region
          %s195 = sand.u32 %s43, 1
          %s196 = scalar_lea.sflag [#allocation3], %s195
          %s197 = sand.u32 %s43, 1
          %s198 = smul.addr %s197, 8
          %s199 = scalar_lea.vmem [#allocation2], %s198
          %s201 = ssub.s32 128, 128
          %202 = vsyncadd %s196, %s201
          %s203 = sadd.s32 %s27, %s26
          %s204 = smul.addr %s203, 128
          %s205 = scalar_lea.hbm %s0, %s204
          %s207 = sshll.u32 %s199, 4
          %s208 = int_to_ptr.vmem [resolvable:$true] %s207
          %210 = dma.hbm_to_vmem [thread:$0]  %s205, 128, %s208, %s196
        $region28: #{tpu_custom_call.1} parent=23 // pred_fallthru
          _
        // Predicated region
        $region29: #{tpu_custom_call.1} parent=23 // pred_check
          %p211 = pneg %p81
        $region30: #{tpu_custom_call.1} parent=23 // pred_check_branch
          %213 = sbr.rel (%p211) target = $region32
        $region31: #{tpu_custom_call.1} parent=23 // pred_region
          %s214 = sand.u32 %s19, 1
          %s215 = scalar_lea.sflag [#allocation6], %s214
          %s216 = sand.u32 %s71, 1
          %s217 = smul.addr %s216, 8
          %s218 = scalar_lea.vmem [#allocation5], %s217
          %s220 = ssub.s32 128, 128
          %221 = vsyncadd %s215, %s220
          %s222 = sadd.s32 %s27, %s26
          %s223 = smul.addr %s222, 128
          %s224 = scalar_lea.hbm %s1, %s223
          %s226 = sshll.u32 %s218, 4
          %s227 = int_to_ptr.vmem [resolvable:$true] %s226
          %229 = dma.hbm_to_vmem [thread:$0]  %s224, 128, %s227, %s215
        $region32: #{tpu_custom_call.1} parent=23 // pred_fallthru
          _
      $region24: #{tpu_custom_call.1} parent=5 // pred_fallthru
        _
      %p230 = scmp.le.s32.totalorder 1, %s19
      %p231 = scmp.lt.s32.totalorder %s19, 3
      %p232 = pnand %p230, %p231
      %p233 = pneg %p232
      // Predicated region
      $region33: #{tpu_custom_call.1} parent=5 // pred_check
        _
      $region34: #{tpu_custom_call.1} parent=5 // pred_check_branch
        %235 = sbr.rel (%p232) target = $region36
      $region35: #{tpu_custom_call.1} parent=5 // pred_region
        %s236 = ssub.s32 %s19, 1
        %s237 = sand.u32 %s46, 1
        %s238 = scalar_lea.sflag [#allocation3], %s237
        %s239 = sand.u32 %s46, 1
        %s240 = smul.addr %s239, 8
        %s241 = scalar_lea.vmem [#allocation2], %s240
        // Predicated region
        $region37: #{tpu_custom_call.1} parent=35 // pred_check
          %p242 = pneg %p59
        $region38: #{tpu_custom_call.1} parent=35 // pred_check_branch
          %244 = sbr.rel (%p242) target = $region40
        $region39: #{tpu_custom_call.1} parent=35 // pred_region
          %245 = dma.done %s238, 128
        $region40: #{tpu_custom_call.1} parent=35 // pred_fallthru
          _
        %s246 = sand.u32 %s24, 1
        %s247 = scalar_lea.sflag [#allocation6], %s246
        %s248 = sand.u32 %s74, 1
        %s249 = smul.addr %s248, 8
        %s250 = scalar_lea.vmem [#allocation5], %s249
        // Predicated region
        $region41: #{tpu_custom_call.1} parent=35 // pred_check
          %p251 = pneg %p87
        $region42: #{tpu_custom_call.1} parent=35 // pred_check_branch
          %253 = sbr.rel (%p251) target = $region44
        $region43: #{tpu_custom_call.1} parent=35 // pred_region
          %254 = dma.done %s247, 128
        $region44: #{tpu_custom_call.1} parent=35 // pred_fallthru
          _
        // Predicated region
        $region45: #{tpu_custom_call.1} parent=35 // pred_check
          %p255 = pneg %p108
        $region46: #{tpu_custom_call.1} parent=35 // pred_check_branch
          %257 = sbr.rel (%p255) target = $region48
        $region47: #{tpu_custom_call.1} parent=35 // pred_region
          %258 = dma.done [#allocation6], 256
        $region48: #{tpu_custom_call.1} parent=35 // pred_fallthru
          _
        %s259 = sand.u32 %s46, 1
        %s260 = scalar_lea.sflag [#allocation3], %s259
        %s261 = sand.u32 %s46, 1
        %s262 = smul.addr %s261, 8
        %s263 = scalar_lea.vmem [#allocation2], %s262
        %p264 = pneg %p59
        %p265 = pneg %p56
        %s266 = sand.u32 %s24, 1
        %s267 = scalar_lea.sflag [#allocation6], %s266
        %s268 = sand.u32 %s74, 1
        %s269 = smul.addr %s268, 8
        %s270 = scalar_lea.vmem [#allocation5], %s269
        %p271 = pneg %p87
        %p272 = pneg %p84
        %p273 = pneg %p108
        %p274 = pneg %p105
        %p275 = pneg %p129
        %p276 = pneg %p126
        %p277 = pneg %p157
        %p278 = pneg %p154
        %s279 = sand.u32 %s144, 1
        %s280 = scalar_lea.sflag [#allocation4], %s279
        %s281 = sand.u32 %s144, 1
        %s282 = smul.addr %s281, 8
        %s283 = scalar_lea.vmem [#allocation8], %s282
        %v284 = vld [vmem:[%s241] sm:$0xff]
        %v285 = vld [vmem:[%s250] sm:$0xff]
        %v286 = vld [vmem:[#allocation7] sm:$0xff]
        %v287 = vld [vmem:[#allocation7 + $0x8] sm:$0xff]
        %v288 = vld [vmem:[%s3] sm:$0x1]
        %v290 = vlaneseq
        %v291 = vshrl.u32 %v290, 7
        %v292 = vsub.s32 0, %v291
        %v293 = vrot.slane %v288, %v292
        %vm295 = vcmask 130048
        %v297 = vsel %vm295, %v285, 0
        %299 = vmatprep.subr.mxu0 0.0
        %300 = vmatpush1.msra.mxu0 %v286
        %301 = vmatprep.subr.mxu0 0.0
        %302 = vmatpush1.msra.mxu0 %v287
        %303 = vmatprep.subr.mxu0 0.0
        %304 = vmatpush1.msra.mxu0 0.0
        %305 = vmatprep.subr.mxu0 0.0
        %306 = vmatpush1.msra.mxu0 0.0
        %307 = vmatprep.subr.mxu0 0.0
        %308 = vmatpush1.msra.mxu0 0.0
        %309 = vmatprep.subr.mxu0 0.0
        %310 = vmatpush1.msra.mxu0 0.0
        %311 = vmatprep.subr.mxu0 0.0
        %312 = vmatpush1.msra.mxu0 0.0
        %313 = vmatprep.subr.mxu0 0.0
        %314 = vmatpush1.msra.mxu0 0.0
        %315 = vmatprep.subr.mxu0 0.0
        %316 = vmatpush1.msra.mxu0 0.0
        %317 = vmatprep.subr.mxu0 0.0
        %318 = vmatpush1.msra.mxu0 0.0
        %319 = vmatprep.subr.mxu0 0.0
        %320 = vmatpush1.msra.mxu0 0.0
        %321 = vmatprep.subr.mxu0 0.0
        %322 = vmatpush1.msra.mxu0 0.0
        %323 = vmatprep.subr.mxu0 0.0
        %324 = vmatpush1.msra.mxu0 0.0
        %325 = vmatprep.subr.mxu0 0.0
        %326 = vmatpush1.msra.mxu0 0.0
        %327 = vmatprep.subr.mxu0 0.0
        %328 = vmatpush1.msra.mxu0 0.0
        %329 = vmatprep.subr.mxu0 0.0
        %330 = vmatpush1.msra.mxu0 0.0
        %331 = vmatprep.subr.mxu0 0.0
        %332 = vmatpush1.msra.mxu0 0.0
        %333 = vmatprep.subr.mxu0 0.0
        %334 = vmatpush1.msra.mxu0 0.0
        %335 = vmatprep.subr.mxu0 0.0
        %336 = vmatpush1.msra.mxu0 0.0
        %337 = vmatprep.subr.mxu0 0.0
        %338 = vmatpush1.msra.mxu0 0.0
        %339 = vmatprep.subr.mxu0 0.0
        %340 = vmatpush1.msra.mxu0 0.0
        %341 = vmatprep.subr.mxu0 0.0
        %342 = vmatpush1.msra.mxu0 0.0
        %343 = vmatprep.subr.mxu0 0.0
        %344 = vmatpush1.msra.mxu0 0.0
        %345 = vmatprep.subr.mxu0 0.0
        %346 = vmatpush1.msra.mxu0 0.0
        %347 = vmatprep.subr.mxu0 0.0
        %348 = vmatpush1.msra.mxu0 0.0
        %349 = vmatprep.subr.mxu0 0.0
        %350 = vmatpush1.msra.mxu0 0.0
        %351 = vmatprep.subr.mxu0 0.0
        %352 = vmatpush1.msra.mxu0 0.0
        %353 = vmatprep.subr.mxu0 0.0
        %354 = vmatpush1.msra.mxu0 0.0
        %355 = vmatprep.subr.mxu0 0.0
        %356 = vmatpush1.msra.mxu0 0.0
        %357 = vmatprep.subr.mxu0 0.0
        %358 = vmatpush1.msra.mxu0 0.0
        %359 = vmatprep.subr.mxu0 0.0
        %360 = vmatpush1.msra.mxu0 0.0
        %361 = vmatprep.subr.mxu0 0.0
        %362 = vmatpush1.msra.mxu0 0.0
        %363 = vmatprep.mubr.f32.mxu0 0.0
        %364 = vmatmul.mubr.f32.gmra.mrb[0].mxu0 %v297
        %v365 = vpop.f32.mrb[0].mxu0
        %v366 = vadd.f32 %v293, %v365
        %v367 = vpop.f32.mrb[0].mxu0
        %368 = vdwg.mxu0
        %vm369 = vcmask 261120
        %v370 = vsel %vm369, %v284, 0.0
        %371 = vadd.xlane.f32.xlu0 %v370
        %v372 = vpop.xlane.xlu0 %371
        %v373 = vmul.f32 %v372, 0.03125
        %v374 = vmul.f32 %v284, %v284
        %v375 = vsel %vm369, %v374, 0.0
        %376 = vadd.xlane.f32.xlu0 %v375
        %v377 = vpop.xlane.xlu0 %376
        %v378 = vmul.f32 %v377, 0.03125
        %v379 = vmul.f32 %v373, %v373
        %v380 = vsub.f32 %v378, %v379
        %v381 = vmax.f32 %v380, 0.0
        %v382 = vadd.f32 %v381, 1e-05
        %v383 = vrsqrt.pop %v382
        %v384 = vsub.f32 %v284, %v373
        %v385 = vmul.f32 %v384, %v383
        %v386 = vmul.f32 %v366, %v385
        %388 = vrot.lane.b32.xlu0 %v366, 96
        %v389 = vpop.permute.xlu0 %388
        %v391 = vadd.f32 %v386, %v389
        %392 = vst.msk [vmem:[%s283] sm:$0xff] %vm369, %v391
        %s393 = sand.u32 %s144, 1
        %s394 = scalar_lea.sflag [#allocation4], %s393
        %s395 = sand.u32 %s144, 1
        %s396 = smul.addr %s395, 8
        %s397 = scalar_lea.vmem [#allocation8], %s396
        // Predicated region
        $region49: #{tpu_custom_call.1} parent=35 // pred_check
          %p398 = pneg %p154
        $region50: #{tpu_custom_call.1} parent=35 // pred_check_branch
          %400 = sbr.rel (%p398) target = $region52
        $region51: #{tpu_custom_call.1} parent=35 // pred_region
          %s402 = ssub.s32 128, 128
          %403 = vsyncadd %s394, %s402
          %s404 = sadd.s32 %s29, %s28
          %s405 = smul.addr %s404, 128
          %s406 = scalar_lea.hbm %s4, %s405
          %s408 = sshll.u32 %s397, 4
          %s409 = int_to_ptr.vmem [resolvable:$true] %s408
          %411 = dma.vmem_to_hbm [thread:$0]  %s409, 128, %s406, %s394
        $region52: #{tpu_custom_call.1} parent=35 // pred_fallthru
          _
      $region36: #{tpu_custom_call.1} parent=5 // pred_fallthru
        _
      %p412 = scmp.le.s32.totalorder 2, %s19
      // Predicated region
      $region53: #{tpu_custom_call.1} parent=5 // pred_check
        %p413 = pneg %p412
      $region54: #{tpu_custom_call.1} parent=5 // pred_check_branch
        %415 = sbr.rel (%p413) target = $region56
      $region55: #{tpu_custom_call.1} parent=5 // pred_region
        %s416 = ssub.s32 %s19, 2
        // Predicated region
        $region57: #{tpu_custom_call.1} parent=55 // pred_check
          %p417 = pneg %p160
        $region58: #{tpu_custom_call.1} parent=55 // pred_check_branch
          %419 = sbr.rel (%p417) target = $region60
        $region59: #{tpu_custom_call.1} parent=55 // pred_region
          %s420 = sand.u32 %s145, 1
          %s421 = scalar_lea.sflag [#allocation4], %s420
          %s422 = sand.u32 %s145, 1
          %s423 = smul.addr %s422, 8
          %s424 = scalar_lea.vmem [#allocation8], %s423
          %425 = dma.done %s421, 128
        $region60: #{tpu_custom_call.1} parent=55 // pred_fallthru
          _
      $region56: #{tpu_custom_call.1} parent=5 // pred_fallthru
        _
    $region6: #{tpu_custom_call.1} parent=1 // loop_footer
      %s23 = sadd.s32 1, %s19
    $region7: #{tpu_custom_call.1} parent=1 // loop_footer_branch
      %18 = sbr.rel target = $region3
    $region8: #{tpu_custom_call.1} parent=1 // loop_exit
      _
    %426 = vsyncpa [#allocation3], 1
    %s427 = scalar_lea.sflag [#allocation3], 1
    %428 = vsyncpa %s427, 1
    %429 = vsyncpa [#allocation6], 1
    %s430 = scalar_lea.sflag [#allocation6], 1
    %431 = vsyncpa %s430, 1
    %432 = vsyncpa [#allocation4], 1
    %s433 = scalar_lea.sflag [#allocation4], 1
    %434 = vsyncpa %s433, 1

</llo_original>
